<compile_context>
chip_gen: v6e
topology: v6e:2x2x1
jax: 0.10.0
libtpu: 0.0.40
codegen_flags: <defaults>
</compile_context>

<pallas_src>
import functools
import math

import jax
import jax.numpy as jnp
from jax.experimental import pallas as pl
from jax.experimental.pallas import tpu as pltpu


# ----------------------------------------------------------------------------
# Kernel: single-step stacked LSTM (all layers fused, no grid).
# ----------------------------------------------------------------------------
def _sigmoid_eup(x):
    # sigmoid(x) == 0.5 * (tanh(0.5 * x) + 1): one transcendental per gate.
    return 0.5 * (jnp.tanh(0.5 * x) + 1.0)


def _decoder_kernel(num_layers, hidden_size, x_ref, h0_ref, c0_ref, *rest):
    """rest = (w_0, b_0, ..., w_{L-1}, b_{L-1}, out_ref, h_out_ref, c_out_ref).

    w_l : (in_l + H, 4H) bf16   packed [W_ih^T ; W_hh^T], gate order [i,f,g,o]
    b_l : (1, 4H)        f32    pre-summed b_ih + b_hh
    """
    H = hidden_size
    w_refs = rest[:2 * num_layers]
    out_ref, h_out_ref, c_out_ref = rest[2 * num_layers:]

    x = x_ref[...]                                   # (B, I) f32, layer-0 input
    for layer in range(num_layers):                  # static unroll over layers
        w_ref = w_refs[2 * layer + 0]                # (in_l + H, 4H) bf16
        b_ref = w_refs[2 * layer + 1]                # (1, 4H) f32
        in_l = w_ref.shape[0] - H                    # static

        h_prev = h0_ref[layer]                       # (B, H) f32
        c_prev = c0_ref[layer]                       # (B, H) f32

        # One packed weight slab per layer (single DMA); consume it through two
        # static, sublane-aligned row-slices (cheap ref views) -> two bf16 MXU
        # dots with f32 accumulation.
        gates = (
            jnp.dot(x.astype(jnp.bfloat16), w_ref[:in_l, :],
                    preferred_element_type=jnp.float32)
            + jnp.dot(h_prev.astype(jnp.bfloat16), w_ref[in_l:, :],
                      preferred_element_type=jnp.float32)
            + b_ref[...]
        )                                            # (B, 4H) f32, [i, f, g, o]

        # NOTE: for H % 128 != 0 (demo) these slices cut inside a lane tile and
        # cost a few XLU selects per layer; pick H as a multiple of 128 in
        # production so they become zero-cost views.
        i_g = _sigmoid_eup(gates[:, 0 * H:1 * H])
        f_g = _sigmoid_eup(gates[:, 1 * H:2 * H])
        g_g = jnp.tanh(gates[:, 2 * H:3 * H])
        o_g = _sigmoid_eup(gates[:, 3 * H:4 * H])

        c_new = f_g * c_prev + i_g * g_g             # f32 cell update
        h_new = o_g * jnp.tanh(c_new)

        h_out_ref[layer] = h_new.astype(h_out_ref.dtype)
        c_out_ref[layer] = c_new.astype(c_out_ref.dtype)
        x = h_new                                    # feed next layer (on-chip)

    out_ref[...] = x.astype(out_ref.dtype)           # output of last layer


# ----------------------------------------------------------------------------
# Wrapper: matches Decoder.forward(input_seq, h, c) -> (output, h, c)
#   input_seq: (batch, input_size)
#   h, c:      (num_layers, batch, hidden_size)
#   params:    list of (packed_W_bf16 (in_l+H, 4H), bias_f32 (1, 4H))
# ----------------------------------------------------------------------------
def decoder_forward(input_seq, h, c, params):
    B, _ = input_seq.shape
    L, _, H = h.shape
    assert len(params) == L

    flat_weights = []
    for (w, b) in params:
        flat_weights += [w, b]

    kernel = functools.partial(_decoder_kernel, L, H)
    n_inputs = 3 + 2 * L
    vmem = lambda: pl.BlockSpec(memory_space=pltpu.MemorySpace.VMEM)

    # Scoped-VMEM hint from the actual operand footprint (inputs + outputs,
    # double-buffer headroom + 4 MiB slack), capped so it is valid on v7x.
    operand_bytes = sum(int(a.size) * a.dtype.itemsize
                        for a in (input_seq, h, c, *flat_weights))
    output_bytes = B * H * 4 + 2 * int(h.size) * 4
    vmem_limit = int(min(max(2 * (operand_bytes + output_bytes) + (4 << 20),
                             16 << 20), 64 << 20))

    out, h_new, c_new = pl.pallas_call(
        kernel,
        out_shape=(
            jax.ShapeDtypeStruct((B, H), jnp.float32),       # output (last h)
            jax.ShapeDtypeStruct((L, B, H), jnp.float32),    # new h
            jax.ShapeDtypeStruct((L, B, H), jnp.float32),    # new c
        ),
        in_specs=[vmem() for _ in range(n_inputs)],
        out_specs=(vmem(), vmem(), vmem()),
        # In-place recurrent state update: h -> h_new, c -> c_new.
        input_output_aliases={1: 1, 2: 2},
        compiler_params=pltpu.CompilerParams(vmem_limit_bytes=vmem_limit),
    )(input_seq, h, c, *flat_weights)
    return out, h_new, c_new


# ----------------------------------------------------------------------------
# Pure-JAX reference for correctness checking (uses the same packed params).
# ----------------------------------------------------------------------------
def decoder_ref(input_seq, h, c, params):
    x = input_seq
    H = h.shape[-1]
    hs, cs = [], []
    for l, (w, b) in enumerate(params):
        xh = jnp.concatenate([x, h[l]], axis=1)
        g = xh @ w.astype(jnp.float32) + b[0]
        i_g = jax.nn.sigmoid(g[:, 0 * H:1 * H])
        f_g = jax.nn.sigmoid(g[:, 1 * H:2 * H])
        g_g = jnp.tanh(g[:, 2 * H:3 * H])
        o_g = jax.nn.sigmoid(g[:, 3 * H:4 * H])
        c_new = f_g * c[l] + i_g * g_g
        h_new = o_g * jnp.tanh(c_new)
        hs.append(h_new)
        cs.append(c_new)
        x = h_new
    return x, jnp.stack(hs, axis=0), jnp.stack(cs, axis=0)


# ----------------------------------------------------------------------------
# Deterministic PyTorch-style init: uniform(-1/sqrt(H), 1/sqrt(H)).
# Packed per layer as bf16 [W_ih^T ; W_hh^T] (in_l+H, 4H); biases pre-summed
# into a single f32 (1, 4H) row.
# ----------------------------------------------------------------------------
def init_lstm_params(key, input_size, hidden_size, num_layers):
    bound = 1.0 / math.sqrt(hidden_size)
    params = []
    for layer in range(num_layers):
        in_sz = input_size if layer == 0 else hidden_size
        key, k1, k2, k3, k4 = jax.random.split(key, 5)
        w_ih_t = jax.random.uniform(k1, (in_sz, 4 * hidden_size),
                                    minval=-bound, maxval=bound, dtype=jnp.float32)
        w_hh_t = jax.random.uniform(k2, (hidden_size, 4 * hidden_size),
                                    minval=-bound, maxval=bound, dtype=jnp.float32)
        b_ih = jax.random.uniform(k3, (4 * hidden_size,),
                                  minval=-bound, maxval=bound, dtype=jnp.float32)
        b_hh = jax.random.uniform(k4, (4 * hidden_size,),
                                  minval=-bound, maxval=bound, dtype=jnp.float32)
        w_packed = jnp.concatenate([w_ih_t, w_hh_t], axis=0).astype(jnp.bfloat16)
        b_packed = (b_ih + b_hh)[None, :]            # f32
        params.append((w_packed, b_packed))
    return params


if __name__ == "__main__":
    # Small shapes consistent with Decoder.forward.
    batch = 2
    input_size, hidden_size, num_layers = 16, 32, 2
    # output_size is stored by the PyTorch module but unused in forward.

    key = jax.random.PRNGKey(0)
    k_x, k_h, k_c, k_p = jax.random.split(key, 4)

    input_seq = jax.random.normal(k_x, (batch, input_size), jnp.float32)
    h0 = jax.random.normal(k_h, (num_layers, batch, hidden_size), jnp.float32)
    c0 = jax.random.normal(k_c, (num_layers, batch, hidden_size), jnp.float32)
    params = init_lstm_params(k_p, input_size, hidden_size, num_layers)

    # Reference FIRST: h0/c0 are donated (aliased in place) to the kernel call.
    out_r, h_r, c_r = decoder_ref(input_seq, h0, c0, params)
    out_r, h_r, c_r = map(jax.block_until_ready, (out_r, h_r, c_r))

    run = jax.jit(decoder_forward, donate_argnums=(1, 2))
    out, h_new, c_new = run(input_seq, h0, c0, params)
    out = jax.block_until_ready(out)
    h_new = jax.block_until_ready(h_new)
    c_new = jax.block_until_ready(c_new)

    assert out.shape == (batch, hidden_size)
    assert h_new.shape == (num_layers, batch, hidden_size)
    assert c_new.shape == (num_layers, batch, hidden_size)
    assert jnp.allclose(out, out_r, atol=1e-2, rtol=1e-3)
    assert jnp.allclose(h_new, h_r, atol=1e-2, rtol=1e-3)
    assert jnp.allclose(c_new, c_r, atol=1e-2, rtol=1e-3)

    print("KERNEL_OK")
</pallas_src>

<mosaic_0001>
module attributes {stable_mosaic.version = 11 : i64} {
  func.func @_decoder_kernel(%arg0: memref<2x16xf32, #tpu.memory_space<vmem>>, %arg1: memref<2x2x32xf32, #tpu.memory_space<vmem>>, %arg2: memref<2x2x32xf32, #tpu.memory_space<vmem>>, %arg3: memref<48x128xbf16, #tpu.memory_space<vmem>>, %arg4: memref<1x128xf32, #tpu.memory_space<vmem>>, %arg5: memref<64x128xbf16, #tpu.memory_space<vmem>>, %arg6: memref<1x128xf32, #tpu.memory_space<vmem>>, %arg7: memref<2x32xf32, #tpu.memory_space<vmem>>, %arg8: memref<2x2x32xf32, #tpu.memory_space<vmem>>, %arg9: memref<2x2x32xf32, #tpu.memory_space<vmem>>) attributes {dimension_semantics = [], scalar_prefetch = 0 : i64, scratch_operands = 0 : i64, tpu.core_type = #tpu.core_type<tc>} {
    %c0 = arith.constant 0 : index
    %c0_0 = arith.constant 0 : index
    %0 = vector.load %arg0[%c0, %c0_0] : memref<2x16xf32, #tpu.memory_space<vmem>>, vector<2x16xf32>
    %c0_1 = arith.constant 0 : index
    %c0_2 = arith.constant 0 : index
    %c0_3 = arith.constant 0 : index
    %1 = vector.load %arg1[%c0_1, %c0_2, %c0_3] : memref<2x2x32xf32, #tpu.memory_space<vmem>>, vector<1x2x32xf32>
    %2 = vector.shape_cast %1 : vector<1x2x32xf32> to vector<2x32xf32>
    %c0_4 = arith.constant 0 : index
    %c0_5 = arith.constant 0 : index
    %c0_6 = arith.constant 0 : index
    %3 = vector.load %arg2[%c0_4, %c0_5, %c0_6] : memref<2x2x32xf32, #tpu.memory_space<vmem>>, vector<1x2x32xf32>
    %4 = vector.shape_cast %3 : vector<1x2x32xf32> to vector<2x32xf32>
    %5 = arith.truncf %0 : vector<2x16xf32> to vector<2x16xbf16>
    %c0_7 = arith.constant 0 : index
    %c0_8 = arith.constant 0 : index
    %6 = vector.load %arg3[%c0_7, %c0_8] : memref<48x128xbf16, #tpu.memory_space<vmem>>, vector<16x128xbf16>
    %cst = arith.constant dense<0.000000e+00> : vector<2x128xf32>
    %7 = tpu.matmul %5, %6, %cst {dimension_numbers = #tpu.dot_dimension_numbers<[1], [0], [0], [1], [0, 0, 1, 1], [], []>} : vector<2x16xbf16>, vector<16x128xbf16>, vector<2x128xf32> -> vector<2x128xf32>
    %8 = arith.truncf %2 : vector<2x32xf32> to vector<2x32xbf16>
    %c16 = arith.constant 16 : index
    %c0_9 = arith.constant 0 : index
    %9 = vector.load %arg3[%c16, %c0_9] : memref<48x128xbf16, #tpu.memory_space<vmem>>, vector<32x128xbf16>
    %cst_10 = arith.constant dense<0.000000e+00> : vector<2x128xf32>
    %10 = tpu.matmul %8, %9, %cst_10 {dimension_numbers = #tpu.dot_dimension_numbers<[1], [0], [0], [1], [0, 0, 1, 1], [], []>} : vector<2x32xbf16>, vector<32x128xbf16>, vector<2x128xf32> -> vector<2x128xf32>
    %11 = arith.addf %7, %10 : vector<2x128xf32>
    %c0_11 = arith.constant 0 : index
    %c0_12 = arith.constant 0 : index
    %12 = vector.load %arg4[%c0_11, %c0_12] : memref<1x128xf32, #tpu.memory_space<vmem>>, vector<1x128xf32>
    %13 = vector.broadcast %12 : vector<1x128xf32> to vector<2x128xf32>
    %14 = arith.addf %11, %13 : vector<2x128xf32>
    %15 = vector.extract_strided_slice %14 {offsets = [0, 0], sizes = [2, 32], strides = [1, 1]} : vector<2x128xf32> to vector<2x32xf32>
    %cst_13 = arith.constant 5.000000e-01 : f32
    %16 = vector.broadcast %cst_13 : f32 to vector<2x32xf32>
    %17 = arith.mulf %16, %15 : vector<2x32xf32>
    %18 = math.tanh %17 : vector<2x32xf32>
    %cst_14 = arith.constant 1.000000e+00 : f32
    %19 = vector.broadcast %cst_14 : f32 to vector<2x32xf32>
    %20 = arith.addf %18, %19 : vector<2x32xf32>
    %cst_15 = arith.constant 5.000000e-01 : f32
    %21 = vector.broadcast %cst_15 : f32 to vector<2x32xf32>
    %22 = arith.mulf %21, %20 : vector<2x32xf32>
    %23 = vector.extract_strided_slice %14 {offsets = [0, 32], sizes = [2, 32], strides = [1, 1]} : vector<2x128xf32> to vector<2x32xf32>
    %cst_16 = arith.constant 5.000000e-01 : f32
    %24 = vector.broadcast %cst_16 : f32 to vector<2x32xf32>
    %25 = arith.mulf %24, %23 : vector<2x32xf32>
    %26 = math.tanh %25 : vector<2x32xf32>
    %cst_17 = arith.constant 1.000000e+00 : f32
    %27 = vector.broadcast %cst_17 : f32 to vector<2x32xf32>
    %28 = arith.addf %26, %27 : vector<2x32xf32>
    %cst_18 = arith.constant 5.000000e-01 : f32
    %29 = vector.broadcast %cst_18 : f32 to vector<2x32xf32>
    %30 = arith.mulf %29, %28 : vector<2x32xf32>
    %31 = vector.extract_strided_slice %14 {offsets = [0, 64], sizes = [2, 32], strides = [1, 1]} : vector<2x128xf32> to vector<2x32xf32>
    %32 = math.tanh %31 : vector<2x32xf32>
    %33 = vector.extract_strided_slice %14 {offsets = [0, 96], sizes = [2, 32], strides = [1, 1]} : vector<2x128xf32> to vector<2x32xf32>
    %cst_19 = arith.constant 5.000000e-01 : f32
    %34 = vector.broadcast %cst_19 : f32 to vector<2x32xf32>
    %35 = arith.mulf %34, %33 : vector<2x32xf32>
    %36 = math.tanh %35 : vector<2x32xf32>
    %cst_20 = arith.constant 1.000000e+00 : f32
    %37 = vector.broadcast %cst_20 : f32 to vector<2x32xf32>
    %38 = arith.addf %36, %37 : vector<2x32xf32>
    %cst_21 = arith.constant 5.000000e-01 : f32
    %39 = vector.broadcast %cst_21 : f32 to vector<2x32xf32>
    %40 = arith.mulf %39, %38 : vector<2x32xf32>
    %41 = arith.mulf %30, %4 : vector<2x32xf32>
    %42 = arith.mulf %22, %32 : vector<2x32xf32>
    %43 = arith.addf %41, %42 : vector<2x32xf32>
    %44 = math.tanh %43 : vector<2x32xf32>
    %45 = arith.mulf %40, %44 : vector<2x32xf32>
    %c0_22 = arith.constant 0 : index
    %c0_23 = arith.constant 0 : index
    %c0_24 = arith.constant 0 : index
    %46 = vector.load %arg8[%c0_22, %c0_23, %c0_24] : memref<2x2x32xf32, #tpu.memory_space<vmem>>, vector<1x2x32xf32>
    %47 = vector.shape_cast %46 : vector<1x2x32xf32> to vector<2x32xf32>
    %48 = vector.shape_cast %45 : vector<2x32xf32> to vector<1x2x32xf32>
    tpu.vector_store %arg8[%c0_22, %c0_23, %c0_24], %48 {strides = array<i32>} : memref<2x2x32xf32, #tpu.memory_space<vmem>>, vector<1x2x32xf32>,
    %c0_25 = arith.constant 0 : index
    %c0_26 = arith.constant 0 : index
    %c0_27 = arith.constant 0 : index
    %49 = vector.load %arg9[%c0_25, %c0_26, %c0_27] : memref<2x2x32xf32, #tpu.memory_space<vmem>>, vector<1x2x32xf32>
    %50 = vector.shape_cast %49 : vector<1x2x32xf32> to vector<2x32xf32>
    %51 = vector.shape_cast %43 : vector<2x32xf32> to vector<1x2x32xf32>
    tpu.vector_store %arg9[%c0_25, %c0_26, %c0_27], %51 {strides = array<i32>} : memref<2x2x32xf32, #tpu.memory_space<vmem>>, vector<1x2x32xf32>,
    %c1 = arith.constant 1 : index
    %c0_28 = arith.constant 0 : index
    %c0_29 = arith.constant 0 : index
    %52 = vector.load %arg1[%c1, %c0_28, %c0_29] : memref<2x2x32xf32, #tpu.memory_space<vmem>>, vector<1x2x32xf32>
    %53 = vector.shape_cast %52 : vector<1x2x32xf32> to vector<2x32xf32>
    %c1_30 = arith.constant 1 : index
    %c0_31 = arith.constant 0 : index
    %c0_32 = arith.constant 0 : index
    %54 = vector.load %arg2[%c1_30, %c0_31, %c0_32] : memref<2x2x32xf32, #tpu.memory_space<vmem>>, vector<1x2x32xf32>
    %55 = vector.shape_cast %54 : vector<1x2x32xf32> to vector<2x32xf32>
    %56 = arith.truncf %45 : vector<2x32xf32> to vector<2x32xbf16>
    %c0_33 = arith.constant 0 : index
    %c0_34 = arith.constant 0 : index
    %57 = vector.load %arg5[%c0_33, %c0_34] : memref<64x128xbf16, #tpu.memory_space<vmem>>, vector<32x128xbf16>
    %cst_35 = arith.constant dense<0.000000e+00> : vector<2x128xf32>
    %58 = tpu.matmul %56, %57, %cst_35 {dimension_numbers = #tpu.dot_dimension_numbers<[1], [0], [0], [1], [0, 0, 1, 1], [], []>} : vector<2x32xbf16>, vector<32x128xbf16>, vector<2x128xf32> -> vector<2x128xf32>
    %59 = arith.truncf %53 : vector<2x32xf32> to vector<2x32xbf16>
    %c32 = arith.constant 32 : index
    %c0_36 = arith.constant 0 : index
    %60 = vector.load %arg5[%c32, %c0_36] : memref<64x128xbf16, #tpu.memory_space<vmem>>, vector<32x128xbf16>
    %cst_37 = arith.constant dense<0.000000e+00> : vector<2x128xf32>
    %61 = tpu.matmul %59, %60, %cst_37 {dimension_numbers = #tpu.dot_dimension_numbers<[1], [0], [0], [1], [0, 0, 1, 1], [], []>} : vector<2x32xbf16>, vector<32x128xbf16>, vector<2x128xf32> -> vector<2x128xf32>
    %62 = arith.addf %58, %61 : vector<2x128xf32>
    %c0_38 = arith.constant 0 : index
    %c0_39 = arith.constant 0 : index
    %63 = vector.load %arg6[%c0_38, %c0_39] : memref<1x128xf32, #tpu.memory_space<vmem>>, vector<1x128xf32>
    %64 = vector.broadcast %63 : vector<1x128xf32> to vector<2x128xf32>
    %65 = arith.addf %62, %64 : vector<2x128xf32>
    %66 = vector.extract_strided_slice %65 {offsets = [0, 0], sizes = [2, 32], strides = [1, 1]} : vector<2x128xf32> to vector<2x32xf32>
    %cst_40 = arith.constant 5.000000e-01 : f32
    %67 = vector.broadcast %cst_40 : f32 to vector<2x32xf32>
    %68 = arith.mulf %67, %66 : vector<2x32xf32>
    %69 = math.tanh %68 : vector<2x32xf32>
    %cst_41 = arith.constant 1.000000e+00 : f32
    %70 = vector.broadcast %cst_41 : f32 to vector<2x32xf32>
    %71 = arith.addf %69, %70 : vector<2x32xf32>
    %cst_42 = arith.constant 5.000000e-01 : f32
    %72 = vector.broadcast %cst_42 : f32 to vector<2x32xf32>
    %73 = arith.mulf %72, %71 : vector<2x32xf32>
    %74 = vector.extract_strided_slice %65 {offsets = [0, 32], sizes = [2, 32], strides = [1, 1]} : vector<2x128xf32> to vector<2x32xf32>
    %cst_43 = arith.constant 5.000000e-01 : f32
    %75 = vector.broadcast %cst_43 : f32 to vector<2x32xf32>
    %76 = arith.mulf %75, %74 : vector<2x32xf32>
    %77 = math.tanh %76 : vector<2x32xf32>
    %cst_44 = arith.constant 1.000000e+00 : f32
    %78 = vector.broadcast %cst_44 : f32 to vector<2x32xf32>
    %79 = arith.addf %77, %78 : vector<2x32xf32>
    %cst_45 = arith.constant 5.000000e-01 : f32
    %80 = vector.broadcast %cst_45 : f32 to vector<2x32xf32>
    %81 = arith.mulf %80, %79 : vector<2x32xf32>
    %82 = vector.extract_strided_slice %65 {offsets = [0, 64], sizes = [2, 32], strides = [1, 1]} : vector<2x128xf32> to vector<2x32xf32>
    %83 = math.tanh %82 : vector<2x32xf32>
    %84 = vector.extract_strided_slice %65 {offsets = [0, 96], sizes = [2, 32], strides = [1, 1]} : vector<2x128xf32> to vector<2x32xf32>
    %cst_46 = arith.constant 5.000000e-01 : f32
    %85 = vector.broadcast %cst_46 : f32 to vector<2x32xf32>
    %86 = arith.mulf %85, %84 : vector<2x32xf32>
    %87 = math.tanh %86 : vector<2x32xf32>
    %cst_47 = arith.constant 1.000000e+00 : f32
    %88 = vector.broadcast %cst_47 : f32 to vector<2x32xf32>
    %89 = arith.addf %87, %88 : vector<2x32xf32>
    %cst_48 = arith.constant 5.000000e-01 : f32
    %90 = vector.broadcast %cst_48 : f32 to vector<2x32xf32>
    %91 = arith.mulf %90, %89 : vector<2x32xf32>
    %92 = arith.mulf %81, %55 : vector<2x32xf32>
    %93 = arith.mulf %73, %83 : vector<2x32xf32>
    %94 = arith.addf %92, %93 : vector<2x32xf32>
    %95 = math.tanh %94 : vector<2x32xf32>
    %96 = arith.mulf %91, %95 : vector<2x32xf32>
    %c1_49 = arith.constant 1 : index
    %c0_50 = arith.constant 0 : index
    %c0_51 = arith.constant 0 : index
    %97 = vector.load %arg8[%c1_49, %c0_50, %c0_51] : memref<2x2x32xf32, #tpu.memory_space<vmem>>, vector<1x2x32xf32>
    %98 = vector.shape_cast %97 : vector<1x2x32xf32> to vector<2x32xf32>
    %99 = vector.shape_cast %96 : vector<2x32xf32> to vector<1x2x32xf32>
    tpu.vector_store %arg8[%c1_49, %c0_50, %c0_51], %99 {strides = array<i32>} : memref<2x2x32xf32, #tpu.memory_space<vmem>>, vector<1x2x32xf32>,
    %c1_52 = arith.constant 1 : index
    %c0_53 = arith.constant 0 : index
    %c0_54 = arith.constant 0 : index
    %100 = vector.load %arg9[%c1_52, %c0_53, %c0_54] : memref<2x2x32xf32, #tpu.memory_space<vmem>>, vector<1x2x32xf32>
    %101 = vector.shape_cast %100 : vector<1x2x32xf32> to vector<2x32xf32>
    %102 = vector.shape_cast %94 : vector<2x32xf32> to vector<1x2x32xf32>
    tpu.vector_store %arg9[%c1_52, %c0_53, %c0_54], %102 {strides = array<i32>} : memref<2x2x32xf32, #tpu.memory_space<vmem>>, vector<1x2x32xf32>,
    %c0_55 = arith.constant 0 : index
    %c0_56 = arith.constant 0 : index
    %103 = vector.load %arg7[%c0_55, %c0_56] : memref<2x32xf32, #tpu.memory_space<vmem>>, vector<2x32xf32>
    tpu.vector_store %arg7[%c0_55, %c0_56], %96 {strides = array<i32>} : memref<2x32xf32, #tpu.memory_space<vmem>>, vector<2x32xf32>,
    return
  }
}

</mosaic_0001>

<llo_original>
// kernel: decoder_forward.1
$region0: #{decoder_forward.1}
  #allocation0 [shape = 'u32[]', space=smem, size = 0x4, offset = 0x4, fixed_abs, tag = 'smem constant byte address 0x4 - core index']
  #allocation1 [shape = 'u32[144,128]{1,0:T(1,128)}', space=vmem, size = 0x12000, scoped, tag = 'internal scratch']
  %s0 = inlined_call_operand.hbm [shape: f32[2,16], index: 0, kind: input, shape index: {}]
  %s1 = inlined_call_operand.hbm [shape: f32[2,2,32], index: 1, kind: input, shape index: {}, may-alias: {1,8}]
  %s2 = inlined_call_operand.hbm [shape: f32[2,2,32], index: 2, kind: input, shape index: {}, may-alias: {2,9}]
  %s3 = inlined_call_operand.hbm [shape: bf16[48,128], index: 3, kind: input, shape index: {}]
  %s4 = inlined_call_operand.vmem [shape: f32[1,128], index: 4, kind: input, shape index: {}]
  %s5 = inlined_call_operand.hbm [shape: bf16[64,128], index: 5, kind: input, shape index: {}]
  %s6 = inlined_call_operand.vmem [shape: f32[1,128], index: 6, kind: input, shape index: {}]
  %s7 = inlined_call_operand.hbm [shape: f32[2,32], index: 7, kind: output, shape index: {0}]
  %s8 = inlined_call_operand.hbm [shape: f32[2,2,32], index: 8, kind: output, shape index: {1}, may-alias: {1,8}]
  %s9 = inlined_call_operand.hbm [shape: f32[2,2,32], index: 9, kind: output, shape index: {2}, may-alias: {2,9}]
  %10 = xla_tuple %s7, %s8, %s9
  %s11 = sld [smem:[#allocation0]]
  $region74: #{decoder_forward.1} parent=0
    _
  %s13 = ssub.s32 1, %s11
  %s14 = scalar_select 0, %s13, %s11
  $region1: #{decoder_forward.1} parent=0
    #allocation2 [shape = 'u8[1024]{0}', space=vmem, size = 0x400, scoped, tag = 'input window, operand 0, single buffered']
    #allocation3 [shape = 's32[1]{0}', space=sflag, size = 0x4, scoped, tag = 'scoped memory for decoder_forward.1']
    #allocation4 [shape = 's32[1]{0}', space=sflag, size = 0x4, scoped, tag = 'scoped memory for decoder_forward.1']
    #allocation5 [shape = 'u8[2048]{0}', space=vmem, size = 0x800, scoped, tag = 'input window, operand 1, single buffered']
    #allocation6 [shape = 's32[1]{0}', space=sflag, size = 0x4, scoped, tag = 'scoped memory for decoder_forward.1']
    #allocation7 [shape = 'u8[2048]{0}', space=vmem, size = 0x800, scoped, tag = 'input window, operand 2, single buffered']
    #allocation8 [shape = 'u8[12288]{0}', space=vmem, size = 0x3000, scoped, tag = 'input window, operand 3, single buffered']
    #allocation9 [shape = 's32[1]{0}', space=sflag, size = 0x4, scoped, tag = 'scoped memory for decoder_forward.1']
    #allocation10 [shape = 'u8[16384]{0}', space=vmem, size = 0x4000, scoped, tag = 'input window, operand 5, single buffered']
    #allocation11 [shape = 'u8[1024]{0}', space=vmem, size = 0x400, scoped, tag = 'output window, operand 0, single buffered']
    #allocation12 [shape = 'u8[2048]{0}', space=vmem, size = 0x800, scoped, tag = 'output window, operand 1, single buffered']
    #allocation13 [shape = 's32[1]{0}', space=sflag, size = 0x4, scoped, tag = 'scoped memory for decoder_forward.1']
    #allocation14 [shape = 'u8[2048]{0}', space=vmem, size = 0x800, scoped, tag = 'output window, operand 2, single buffered']
    %15 = vsyncpa [#allocation3], 0
    %16 = vsyncpa [#allocation6], 0
    %17 = vsyncpa [#allocation9], 0
    %18 = vsyncpa [#allocation4], 0
    %19 = vsyncpa [#allocation13], 0
    // Predicated region
    $region2: #{decoder_forward.1} parent=1 // pred_check
      _
    $region3: #{decoder_forward.1} parent=1 // pred_check_branch
      %21 = sbr.rel (0) target = $region5
    $region4: #{decoder_forward.1} parent=1 // pred_region
      %s23 = ssub.s32 32, 32
      %24 = vsyncadd [#allocation3], %s23
      %s26 = sshll.u32 [#allocation2], 4
      %s27 = int_to_ptr.vmem [resolvable:$true] %s26
      %29 = dma.hbm_to_vmem [thread:$0]  %s0, 32, %s27, [#allocation3]
    $region5: #{decoder_forward.1} parent=1 // pred_fallthru
      _
    // Predicated region
    $region6: #{decoder_forward.1} parent=1 // pred_check
      _
    $region7: #{decoder_forward.1} parent=1 // pred_check_branch
      %31 = sbr.rel (0) target = $region9
    $region8: #{decoder_forward.1} parent=1 // pred_region
      %s33 = ssub.s32 64, 64
      %34 = vsyncadd [#allocation6], %s33
      %s35 = sshll.u32 [#allocation5], 4
      %s36 = int_to_ptr.vmem [resolvable:$true] %s35
      %41 = dma.hbm_to_vmem [thread:$0]  %s1, 64, %s36, [#allocation6], 32, 32, 2
    $region9: #{decoder_forward.1} parent=1 // pred_fallthru
      _
    // Predicated region
    $region10: #{decoder_forward.1} parent=1 // pred_check
      _
    $region11: #{decoder_forward.1} parent=1 // pred_check_branch
      %43 = sbr.rel (0) target = $region13
    $region12: #{decoder_forward.1} parent=1 // pred_region
      %s45 = ssub.s32 64, 64
      %46 = vsyncadd [#allocation6], %s45
      %s47 = sshll.u32 [#allocation7], 4
      %s48 = int_to_ptr.vmem [resolvable:$true] %s47
      %53 = dma.hbm_to_vmem [thread:$0]  %s2, 64, %s48, [#allocation6], 32, 32, 2
    $region13: #{decoder_forward.1} parent=1 // pred_fallthru
      _
    // Predicated region
    $region14: #{decoder_forward.1} parent=1 // pred_check
      _
    $region15: #{decoder_forward.1} parent=1 // pred_check_branch
      %55 = sbr.rel (0) target = $region17
    $region16: #{decoder_forward.1} parent=1 // pred_region
      %s57 = ssub.s32 384, 384
      %58 = vsyncadd [#allocation9], %s57
      %s59 = sshll.u32 [#allocation8], 4
      %s60 = int_to_ptr.vmem [resolvable:$true] %s59
      %65 = dma.hbm_to_vmem [thread:$0]  %s3, 384, %s60, [#allocation9], 64, 64, 4
    $region17: #{decoder_forward.1} parent=1 // pred_fallthru
      _
    // Predicated region
    $region18: #{decoder_forward.1} parent=1 // pred_check
      _
    $region19: #{decoder_forward.1} parent=1 // pred_check_branch
      %67 = sbr.rel (0) target = $region21
    $region20: #{decoder_forward.1} parent=1 // pred_region
      _
    $region21: #{decoder_forward.1} parent=1 // pred_fallthru
      _
    // Predicated region
    $region22: #{decoder_forward.1} parent=1 // pred_check
      _
    $region23: #{decoder_forward.1} parent=1 // pred_check_branch
      %69 = sbr.rel (0) target = $region25
    $region24: #{decoder_forward.1} parent=1 // pred_region
      %s71 = ssub.s32 512, 512
      %72 = vsyncadd [#allocation9], %s71
      %s73 = sshll.u32 [#allocation10], 4
      %s74 = int_to_ptr.vmem [resolvable:$true] %s73
      %79 = dma.hbm_to_vmem [thread:$0]  %s5, 512, %s74, [#allocation9], 64, 64, 4
    $region25: #{decoder_forward.1} parent=1 // pred_fallthru
      _
    // Predicated region
    $region26: #{decoder_forward.1} parent=1 // pred_check
      _
    $region27: #{decoder_forward.1} parent=1 // pred_check_branch
      %81 = sbr.rel (0) target = $region29
    $region28: #{decoder_forward.1} parent=1 // pred_region
      _
    $region29: #{decoder_forward.1} parent=1 // pred_fallthru
      _
    // Predicated region
    $region30: #{decoder_forward.1} parent=1 // pred_check
      _
    $region31: #{decoder_forward.1} parent=1 // pred_check_branch
      %83 = sbr.rel (0) target = $region33
    $region32: #{decoder_forward.1} parent=1 // pred_region
      %84 = dma.done [#allocation3], 32
    $region33: #{decoder_forward.1} parent=1 // pred_fallthru
      _
    // Predicated region
    $region34: #{decoder_forward.1} parent=1 // pred_check
      _
    $region35: #{decoder_forward.1} parent=1 // pred_check_branch
      %86 = sbr.rel (0) target = $region37
    $region36: #{decoder_forward.1} parent=1 // pred_region
      %87 = dma.done [#allocation6], 64
    $region37: #{decoder_forward.1} parent=1 // pred_fallthru
      _
    // Predicated region
    $region38: #{decoder_forward.1} parent=1 // pred_check
      _
    $region39: #{decoder_forward.1} parent=1 // pred_check_branch
      %89 = sbr.rel (0) target = $region41
    $region40: #{decoder_forward.1} parent=1 // pred_region
      %90 = dma.done [#allocation6], 64
    $region41: #{decoder_forward.1} parent=1 // pred_fallthru
      _
    // Predicated region
    $region42: #{decoder_forward.1} parent=1 // pred_check
      _
    $region43: #{decoder_forward.1} parent=1 // pred_check_branch
      %92 = sbr.rel (0) target = $region45
    $region44: #{decoder_forward.1} parent=1 // pred_region
      %93 = dma.done [#allocation9], 384
    $region45: #{decoder_forward.1} parent=1 // pred_fallthru
      _
    // Predicated region
    $region46: #{decoder_forward.1} parent=1 // pred_check
      _
    $region47: #{decoder_forward.1} parent=1 // pred_check_branch
      %95 = sbr.rel (0) target = $region49
    $region48: #{decoder_forward.1} parent=1 // pred_region
      %96 = dma.done [#allocation9], 512
    $region49: #{decoder_forward.1} parent=1 // pred_fallthru
      _
    %v98 = vld [vmem:[#allocation2] sm:$0x3]
    %v99 = vld [vmem:[#allocation5] sm:$0x3]
    %v100 = vld [vmem:[#allocation7] sm:$0x3]
    %v101 = vpack.c.bf16 %v98, %v98
    %v102 = vld [vmem:[#allocation8] sm:$0xf]
    %v103 = vld [vmem:[#allocation8 + $0x4] sm:$0xf]
    %v104 = vpack.c.bf16 %v99, %v99
    %v105 = vld [vmem:[#allocation8 + $0x8] sm:$0xf]
    %v106 = vld [vmem:[#allocation8 + $0xc] sm:$0xf]
    %v107 = vld [vmem:[#allocation8 + $0x10] sm:$0xf]
    %v108 = vld [vmem:[#allocation8 + $0x14] sm:$0xf]
    %v113 = vunpack.c.l.b16 %v105
    %v114 = vunpack.c.l.b16 %v106
    %v115 = vunpack.c.l.b16 %v107
    %v116 = vunpack.c.l.b16 %v108
    %v117 = vpack.c.b16 %v114, %v113
    %v118 = vpack.c.b16 %v116, %v115
    %vm121 = vcmask 261120
    %v123 = vsel %vm121, %v104, 0
    %125 = vmatprep.subr.bf16.mxu0 0
    %126 = vmatpush1.bf16.msra.mxu0 0
    %127 = vmatprep.subr.bf16.mxu0 0
    %128 = vmatpush1.bf16.msra.mxu0 0
    %129 = vmatprep.subr.bf16.mxu0 0
    %130 = vmatpush1.bf16.msra.mxu0 0
    %131 = vmatprep.subr.bf16.mxu0 0
    %132 = vmatpush1.bf16.msra.mxu0 0
    %133 = vmatprep.subr.bf16.mxu0 0
    %134 = vmatpush1.bf16.msra.mxu0 0
    %135 = vmatprep.subr.bf16.mxu0 0
    %136 = vmatpush1.bf16.msra.mxu0 0
    %137 = vmatprep.subr.bf16.mxu0 0
    %138 = vmatpush1.bf16.msra.mxu0 %v118
    %139 = vmatprep.subr.bf16.mxu0 0
    %140 = vmatpush1.bf16.msra.mxu0 %v117
    %141 = vmatprep.subr.bf16.mxu0 0
    %142 = vmatpush2.bf16.msra.mxu0 0
    %143 = vmatprep.subr.bf16.mxu0 0
    %144 = vmatpush2.bf16.msra.mxu0 0
    %145 = vmatprep.subr.bf16.mxu0 0
    %146 = vmatpush2.bf16.msra.mxu0 0
    %147 = vmatprep.subr.bf16.mxu0 0
    %148 = vmatpush2.bf16.msra.mxu0 0
    %149 = vmatprep.subr.bf16.mxu0 0
    %150 = vmatpush2.bf16.msra.mxu0 0
    %151 = vmatprep.subr.bf16.mxu0 0
    %152 = vmatpush2.bf16.msra.mxu0 0
    %153 = vmatprep.subr.bf16.mxu0 0
    %154 = vmatpush2.bf16.msra.mxu0 0
    %155 = vmatprep.subr.bf16.mxu0 0
    %156 = vmatpush2.bf16.msra.mxu0 0
    %157 = vmatprep.mubr.bf16.mxu0 0
    %158 = vmatmul.mubr.bf16.gmra.mxu0 %v123
    %v159 = vpop.f32.mrf.mxu0
    %v160 = vadd.f32 0.0, %v159
    %v161 = vpop.f32.mrf.mxu0
    %v162 = vpop.f32.mrf.mxu0
    %v163 = vpop.f32.mrf.mxu0
    %164 = vdwg.mxu0
    %v167 = vunpack.c.l.b16 %v102
    %v168 = vunpack.c.l.b16 %v103
    %v169 = vpack.c.b16 %v168, %v167
    %vm171 = vcmask 130048
    %v173 = vsel %vm171, %v101, 0
    %175 = vmatprep.subr.bf16.mxu0 0
    %176 = vmatpush1.bf16.msra.mxu0 0
    %177 = vmatprep.subr.bf16.mxu0 0
    %178 = vmatpush1.bf16.msra.mxu0 0
    %179 = vmatprep.subr.bf16.mxu0 0
    %180 = vmatpush1.bf16.msra.mxu0 0
    %181 = vmatprep.subr.bf16.mxu0 0
    %182 = vmatpush1.bf16.msra.mxu0 0
    %183 = vmatprep.subr.bf16.mxu0 0
    %184 = vmatpush1.bf16.msra.mxu0 0
    %185 = vmatprep.subr.bf16.mxu0 0
    %186 = vmatpush1.bf16.msra.mxu0 0
    %187 = vmatprep.subr.bf16.mxu0 0
    %188 = vmatpush1.bf16.msra.mxu0 0
    %189 = vmatprep.subr.bf16.mxu0 0
    %190 = vmatpush1.bf16.msra.mxu0 %v169
    %191 = vmatprep.subr.bf16.mxu0 0
    %192 = vmatpush2.bf16.msra.mxu0 0
    %193 = vmatprep.subr.bf16.mxu0 0
    %194 = vmatpush2.bf16.msra.mxu0 0
    %195 = vmatprep.subr.bf16.mxu0 0
    %196 = vmatpush2.bf16.msra.mxu0 0
    %197 = vmatprep.subr.bf16.mxu0 0
    %198 = vmatpush2.bf16.msra.mxu0 0
    %199 = vmatprep.subr.bf16.mxu0 0
    %200 = vmatpush2.bf16.msra.mxu0 0
    %201 = vmatprep.subr.bf16.mxu0 0
    %202 = vmatpush2.bf16.msra.mxu0 0
    %203 = vmatprep.subr.bf16.mxu0 0
    %204 = vmatpush2.bf16.msra.mxu0 0
    %205 = vmatprep.subr.bf16.mxu0 0
    %206 = vmatpush2.bf16.msra.mxu0 0
    %207 = vmatprep.mubr.bf16.mxu0 0
    %208 = vmatmul.mubr.bf16.gmra.mxu0 %v173
    %v209 = vpop.f32.mrf.mxu0
    %v210 = vadd.f32 %v160, %v209
    %v211 = vpop.f32.mrf.mxu0
    %v212 = vpop.f32.mrf.mxu0
    %v213 = vpop.f32.mrf.mxu0
    %214 = vdwg.mxu0
    %v215 = vld [vmem:[%s4] sm:$0x1]
    %v217 = vlaneseq
    %v218 = vshrl.u32 %v217, 7
    %v219 = vsub.s32 0, %v218
    %v220 = vrot.slane %v215, %v219
    %v222 = vadd.f32 %v210, %v220
    %v223 = vmul.f32 %v222, 0.5
    %v224 = vtanh.pop %v223
    %v225 = vadd.f32 %v224, 1.0
    %v226 = vmul.f32 %v225, 0.5
    %v227 = vtanh.pop %v222
    %229 = vrot.lane.b32.xlu0 %v100, 32
    %v230 = vpop.permute.xlu0 %229
    %v232 = vmul.f32 %v226, %v230
    %234 = vrot.lane.b32.xlu0 %v227, 64
    %v235 = vpop.permute.xlu0 %234
    %v237 = vmul.f32 %v226, %v235
    %239 = vrot.lane.b32.xlu0 %v237, 32
    %v240 = vpop.permute.xlu0 %239
    %v242 = vadd.f32 %v232, %v240
    %v243 = vtanh.pop %v242
    %245 = vrot.lane.b32.xlu0 %v243, 64
    %v246 = vpop.permute.xlu0 %245
    %v248 = vmul.f32 %v226, %v246
    %250 = vrot.lane.b32.xlu0 %v248, 32
    %v251 = vpop.permute.xlu0 %250
    %vm253 = vcmask 254976
    %254 = vst.msk [vmem:[#allocation12] sm:$0x3] %vm253, %v251
    %256 = vrot.lane.b32.xlu0 %v242, 96
    %v257 = vpop.permute.xlu0 %256
    %259 = vst.msk [vmem:[#allocation14] sm:$0x3] %vm253, %v257
    %s260 = scalar_lea.vmem [#allocation5], 2
    %v261 = vld [vmem:[%s260] sm:$0x3]
    %s262 = scalar_lea.vmem [#allocation7], 2
    %v263 = vld [vmem:[%s262] sm:$0x3]
    %v264 = vpack.c.bf16 %v248, %v248
    %v265 = vld [vmem:[#allocation10] sm:$0xf]
    %v266 = vld [vmem:[#allocation10 + $0x4] sm:$0xf]
    %v267 = vld [vmem:[#allocation10 + $0x8] sm:$0xf]
    %v268 = vld [vmem:[#allocation10 + $0xc] sm:$0xf]
    %v269 = vpack.c.bf16 %v261, %v261
    %v270 = vld [vmem:[#allocation10 + $0x10] sm:$0xf]
    %v271 = vld [vmem:[#allocation10 + $0x14] sm:$0xf]
    %v272 = vld [vmem:[#allocation10 + $0x18] sm:$0xf]
    %v273 = vld [vmem:[#allocation10 + $0x1c] sm:$0xf]
    %v278 = vunpack.c.l.b16 %v270
    %v279 = vunpack.c.l.b16 %v271
    %v280 = vunpack.c.l.b16 %v272
    %v281 = vunpack.c.l.b16 %v273
    %v282 = vpack.c.b16 %v279, %v278
    %v283 = vpack.c.b16 %v281, %v280
    %v287 = vsel %vm121, %v269, 0
    %289 = vmatprep.subr.bf16.mxu0 0
    %290 = vmatpush1.bf16.msra.mxu0 0
    %291 = vmatprep.subr.bf16.mxu0 0
    %292 = vmatpush1.bf16.msra.mxu0 0
    %293 = vmatprep.subr.bf16.mxu0 0
    %294 = vmatpush1.bf16.msra.mxu0 0
    %295 = vmatprep.subr.bf16.mxu0 0
    %296 = vmatpush1.bf16.msra.mxu0 0
    %297 = vmatprep.subr.bf16.mxu0 0
    %298 = vmatpush1.bf16.msra.mxu0 0
    %299 = vmatprep.subr.bf16.mxu0 0
    %300 = vmatpush1.bf16.msra.mxu0 0
    %301 = vmatprep.subr.bf16.mxu0 0
    %302 = vmatpush1.bf16.msra.mxu0 %v283
    %303 = vmatprep.subr.bf16.mxu0 0
    %304 = vmatpush1.bf16.msra.mxu0 %v282
    %305 = vmatprep.subr.bf16.mxu0 0
    %306 = vmatpush2.bf16.msra.mxu0 0
    %307 = vmatprep.subr.bf16.mxu0 0
    %308 = vmatpush2.bf16.msra.mxu0 0
    %309 = vmatprep.subr.bf16.mxu0 0
    %310 = vmatpush2.bf16.msra.mxu0 0
    %311 = vmatprep.subr.bf16.mxu0 0
    %312 = vmatpush2.bf16.msra.mxu0 0
    %313 = vmatprep.subr.bf16.mxu0 0
    %314 = vmatpush2.bf16.msra.mxu0 0
    %315 = vmatprep.subr.bf16.mxu0 0
    %316 = vmatpush2.bf16.msra.mxu0 0
    %317 = vmatprep.subr.bf16.mxu0 0
    %318 = vmatpush2.bf16.msra.mxu0 0
    %319 = vmatprep.subr.bf16.mxu0 0
    %320 = vmatpush2.bf16.msra.mxu0 0
    %321 = vmatprep.mubr.bf16.mxu0 0
    %322 = vmatmul.mubr.bf16.gmra.mxu0 %v287
    %v323 = vpop.f32.mrf.mxu0
    %v324 = vadd.f32 0.0, %v323
    %v325 = vpop.f32.mrf.mxu0
    %v326 = vpop.f32.mrf.mxu0
    %v327 = vpop.f32.mrf.mxu0
    %328 = vdwg.mxu0
    %330 = vrot.lane.b32.xlu0 %v264, 32
    %v331 = vpop.permute.xlu0 %330
    %v336 = vunpack.c.l.b16 %v265
    %v337 = vunpack.c.l.b16 %v266
    %v338 = vunpack.c.l.b16 %v267
    %v339 = vunpack.c.l.b16 %v268
    %v340 = vpack.c.b16 %v337, %v336
    %v341 = vpack.c.b16 %v339, %v338
    %v345 = vsel %vm121, %v331, 0
    %347 = vmatprep.subr.bf16.mxu0 0
    %348 = vmatpush1.bf16.msra.mxu0 0
    %349 = vmatprep.subr.bf16.mxu0 0
    %350 = vmatpush1.bf16.msra.mxu0 0
    %351 = vmatprep.subr.bf16.mxu0 0
    %352 = vmatpush1.bf16.msra.mxu0 0
    %353 = vmatprep.subr.bf16.mxu0 0
    %354 = vmatpush1.bf16.msra.mxu0 0
    %355 = vmatprep.subr.bf16.mxu0 0
    %356 = vmatpush1.bf16.msra.mxu0 0
    %357 = vmatprep.subr.bf16.mxu0 0
    %358 = vmatpush1.bf16.msra.mxu0 0
    %359 = vmatprep.subr.bf16.mxu0 0
    %360 = vmatpush1.bf16.msra.mxu0 %v341
    %361 = vmatprep.subr.bf16.mxu0 0
    %362 = vmatpush1.bf16.msra.mxu0 %v340
    %363 = vmatprep.subr.bf16.mxu0 0
    %364 = vmatpush2.bf16.msra.mxu0 0
    %365 = vmatprep.subr.bf16.mxu0 0
    %366 = vmatpush2.bf16.msra.mxu0 0
    %367 = vmatprep.subr.bf16.mxu0 0
    %368 = vmatpush2.bf16.msra.mxu0 0
    %369 = vmatprep.subr.bf16.mxu0 0
    %370 = vmatpush2.bf16.msra.mxu0 0
    %371 = vmatprep.subr.bf16.mxu0 0
    %372 = vmatpush2.bf16.msra.mxu0 0
    %373 = vmatprep.subr.bf16.mxu0 0
    %374 = vmatpush2.bf16.msra.mxu0 0
    %375 = vmatprep.subr.bf16.mxu0 0
    %376 = vmatpush2.bf16.msra.mxu0 0
    %377 = vmatprep.subr.bf16.mxu0 0
    %378 = vmatpush2.bf16.msra.mxu0 0
    %379 = vmatprep.mubr.bf16.mxu0 0
    %380 = vmatmul.mubr.bf16.gmra.mxu0 %v345
    %v381 = vpop.f32.mrf.mxu0
    %v382 = vadd.f32 %v324, %v381
    %v383 = vpop.f32.mrf.mxu0
    %v384 = vpop.f32.mrf.mxu0
    %v385 = vpop.f32.mrf.mxu0
    %386 = vdwg.mxu0
    %v387 = vld [vmem:[%s6] sm:$0x1]
    %v389 = vlaneseq
    %v390 = vshrl.u32 %v389, 7
    %v391 = vsub.s32 0, %v390
    %v392 = vrot.slane %v387, %v391
    %v394 = vadd.f32 %v382, %v392
    %v395 = vmul.f32 %v394, 0.5
    %v396 = vtanh.pop %v395
    %v397 = vadd.f32 %v396, 1.0
    %v398 = vmul.f32 %v397, 0.5
    %v399 = vtanh.pop %v394
    %401 = vrot.lane.b32.xlu0 %v263, 32
    %v402 = vpop.permute.xlu0 %401
    %v404 = vmul.f32 %v398, %v402
    %406 = vrot.lane.b32.xlu0 %v399, 64
    %v407 = vpop.permute.xlu0 %406
    %v409 = vmul.f32 %v398, %v407
    %411 = vrot.lane.b32.xlu0 %v409, 32
    %v412 = vpop.permute.xlu0 %411
    %v414 = vadd.f32 %v404, %v412
    %v415 = vtanh.pop %v414
    %417 = vrot.lane.b32.xlu0 %v415, 64
    %v418 = vpop.permute.xlu0 %417
    %v420 = vmul.f32 %v398, %v418
    %422 = vrot.lane.b32.xlu0 %v420, 32
    %v423 = vpop.permute.xlu0 %422
    %s425 = scalar_lea.vmem [#allocation12], 2
    %426 = vst.msk [vmem:[%s425] sm:$0x3] %vm253, %v423
    %428 = vrot.lane.b32.xlu0 %v414, 96
    %v429 = vpop.permute.xlu0 %428
    %s431 = scalar_lea.vmem [#allocation14], 2
    %432 = vst.msk [vmem:[%s431] sm:$0x3] %vm253, %v429
    %433 = vst.msk [vmem:[#allocation11] sm:$0x3] %vm253, %v423
    // Predicated region
    $region50: #{decoder_forward.1} parent=1 // pred_check
      _
    $region51: #{decoder_forward.1} parent=1 // pred_check_branch
      %435 = sbr.rel (0) target = $region53
    $region52: #{decoder_forward.1} parent=1 // pred_region
      %s437 = ssub.s32 32, 32
      %438 = vsyncadd [#allocation4], %s437
      %s440 = sshll.u32 [#allocation11], 4
      %s441 = int_to_ptr.vmem [resolvable:$true] %s440
      %443 = dma.vmem_to_hbm [thread:$0]  %s441, 32, %s7, [#allocation4]
    $region53: #{decoder_forward.1} parent=1 // pred_fallthru
      _
    // Predicated region
    $region54: #{decoder_forward.1} parent=1 // pred_check
      _
    $region55: #{decoder_forward.1} parent=1 // pred_check_branch
      %445 = sbr.rel (0) target = $region57
    $region56: #{decoder_forward.1} parent=1 // pred_region
      %s447 = ssub.s32 64, 64
      %448 = vsyncadd [#allocation13], %s447
      %s449 = sshll.u32 [#allocation12], 4
      %s450 = int_to_ptr.vmem [resolvable:$true] %s449
      %455 = dma.vmem_to_hbm [thread:$0]  %s450, 64, %s8, [#allocation13], 32, 32, 2
    $region57: #{decoder_forward.1} parent=1 // pred_fallthru
      _
    // Predicated region
    $region58: #{decoder_forward.1} parent=1 // pred_check
      _
    $region59: #{decoder_forward.1} parent=1 // pred_check_branch
      %457 = sbr.rel (0) target = $region61
    $region60: #{decoder_forward.1} parent=1 // pred_region
      %s459 = ssub.s32 64, 64
      %460 = vsyncadd [#allocation13], %s459
      %s461 = sshll.u32 [#allocation14], 4
      %s462 = int_to_ptr.vmem [resolvable:$true] %s461
      %467 = dma.vmem_to_hbm [thread:$0]  %s462, 64, %s9, [#allocation13], 32, 32, 2
    $region61: #{decoder_forward.1} parent=1 // pred_fallthru
      _
    // Predicated region
    $region62: #{decoder_forward.1} parent=1 // pred_check
      _
    $region63: #{decoder_forward.1} parent=1 // pred_check_branch
      %469 = sbr.rel (0) target = $region65
    $region64: #{decoder_forward.1} parent=1 // pred_region
      %470 = dma.done [#allocation4], 32
    $region65: #{decoder_forward.1} parent=1 // pred_fallthru
      _
    // Predicated region
    $region66: #{decoder_forward.1} parent=1 // pred_check
      _
    $region67: #{decoder_forward.1} parent=1 // pred_check_branch
      %472 = sbr.rel (0) target = $region69
    $region68: #{decoder_forward.1} parent=1 // pred_region
      %473 = dma.done [#allocation13], 64
    $region69: #{decoder_forward.1} parent=1 // pred_fallthru
      _
    // Predicated region
    $region70: #{decoder_forward.1} parent=1 // pred_check
      _
    $region71: #{decoder_forward.1} parent=1 // pred_check_branch
      %475 = sbr.rel (0) target = $region73
    $region72: #{decoder_forward.1} parent=1 // pred_region
      %476 = dma.done [#allocation13], 64
    $region73: #{decoder_forward.1} parent=1 // pred_fallthru
      _
    %477 = vsyncpa [#allocation3], 1
    %478 = vsyncpa [#allocation6], 1
    %479 = vsyncpa [#allocation9], 1
    %480 = vsyncpa [#allocation4], 1
    %481 = vsyncpa [#allocation13], 1

</llo_original>
